<compile_context>
chip_gen: v6e
topology: v6e:2x2x1
jax: 0.10.0
libtpu: 0.0.40
codegen_flags: <defaults>
</compile_context>

<pallas_src>
from functools import partial

import jax
import jax.numpy as jnp
from jax.experimental import pallas as pl
from jax.experimental.pallas import tpu as pltpu

F_PACK = 128    # packed filter lanes (all branches share one 128-lane N)
OUT_PAD = 128   # padded FC output lanes


def _round_up(x, m):
    return (x + m - 1) // m * m


# ---------------------------------------------------------------------------
# Fused kernel: im2col + single packed conv matmul + mask + max-over-time +
# bias + ReLU + single packed FC matmul.
# ---------------------------------------------------------------------------
def textcnn_fused_kernel(emb_ref, w_conv_ref, conv_b_ref, mask_ref,
                         fc_w_ref, fc_b_ref, out_ref, x_ref):
    """
    emb_ref    : (TB, s_pad, E)      bf16  zero-padded embedded batch tile
    w_conv_ref : (max_fs*E, F_PACK)  bf16  packed conv weights (all branches)
    conv_b_ref : (1, F_PACK)         f32   packed conv bias
    mask_ref   : (l_pad, F_PACK)     f32   additive time mask (0 valid, -1e30 pad)
    fc_w_ref   : (F_PACK, OUT_PAD)   bf16  packed FC weight
    fc_b_ref   : (1, OUT_PAD)        f32   packed FC bias
    out_ref    : (TB, OUT_PAD)       f32
    x_ref      : (TB*l_pad, max_fs*E) bf16 im2col scratch
    """
    tb, _, E = emb_ref.shape
    K, f_pack = w_conv_ref.shape
    max_fs = K // E
    l_pad = mask_ref.shape[0]
    M = tb * l_pad

    # im2col: each tap sliced exactly once and lane-concatenated into scratch.
    for k in range(max_fs):                                   # static unroll
        x_ref[:, k * E:(k + 1) * E] = emb_ref[:, k:k + l_pad, :].reshape(M, E)

    # One packed conv matmul for all branches/filters (bf16 x bf16, f32 acc).
    h = jnp.dot(x_ref[...], w_conv_ref[...],
                preferred_element_type=jnp.float32)           # (M, F_PACK)

    # Mask invalid time positions with -1e30, then max over time.
    h = h.reshape(tb, l_pad, f_pack) + mask_ref[...][None, :, :]
    pooled = jnp.max(h, axis=1)                               # (TB, F_PACK)

    # Per-filter bias + ReLU commute with max over time -> apply after pooling.
    pooled = jnp.maximum(pooled + conv_b_ref[...], 0.0)

    # Single packed FC matmul.
    out_ref[...] = (jnp.dot(pooled.astype(fc_w_ref.dtype), fc_w_ref[...],
                            preferred_element_type=jnp.float32)
                    + fc_b_ref[...])


# ---------------------------------------------------------------------------
# Forward wrapper (single jit: gather + pad + pack weights + fused kernel)
# ---------------------------------------------------------------------------
@partial(jax.jit, static_argnames=("filter_sizes", "output_dim", "batch_tile"))
def textcnn_forward(text, params, filter_sizes, output_dim, batch_tile=8):
    emb_table = params["embedding"]                    # (V, E) bf16
    B, S = text.shape
    E = emb_table.shape[1]
    F = params["conv_b"][0].shape[0]                   # n_filters per branch
    n = len(filter_sizes)
    min_fs, max_fs = min(filter_sizes), max(filter_sizes)
    assert n * F <= F_PACK and output_dim <= OUT_PAD

    l_pad = _round_up(S - min_fs + 1, 8)               # padded conv positions
    s_pad = _round_up(l_pad + max_fs - 1, 8)           # padded sequence length
    b_pad = _round_up(B, batch_tile)                   # padded batch

    # --- pack all branches into single conv / FC weights (tiny, traced once) ---
    w_conv = jnp.zeros((max_fs * E, F_PACK), jnp.bfloat16)
    b_conv = jnp.zeros((1, F_PACK), jnp.float32)
    mask = jnp.zeros((l_pad, F_PACK), jnp.float32)
    for i, fs in enumerate(filter_sizes):
        lo = i * F
        w_conv = w_conv.at[:fs * E, lo:lo + F].set(
            params["conv_w"][i].reshape(fs * E, F))    # taps >= fs stay zero
        b_conv = b_conv.at[0, lo:lo + F].set(params["conv_b"][i])
        L = S - fs + 1                                  # valid conv positions
        mask = mask.at[L:, lo:lo + F].set(-1e30)
    fc_w = jnp.zeros((F_PACK, OUT_PAD), jnp.bfloat16)
    fc_w = fc_w.at[:n * F, :output_dim].set(params["fc_w"])
    fc_b = jnp.zeros((1, OUT_PAD), jnp.float32)
    fc_b = fc_b.at[0, :output_dim].set(params["fc_b"])

    # Embedding gather + zero pad (bf16 -> half the activation DMA bytes).
    emb = emb_table[text]                               # (B, S, E) bf16
    emb = jnp.pad(emb, ((0, b_pad - B), (0, s_pad - S), (0, 0)))

    out = pl.pallas_call(
        textcnn_fused_kernel,
        out_shape=jax.ShapeDtypeStruct((b_pad, OUT_PAD), jnp.float32),
        grid=(b_pad // batch_tile,),
        in_specs=[
            pl.BlockSpec((batch_tile, s_pad, E), lambda b: (b, 0, 0)),
            pl.BlockSpec((max_fs * E, F_PACK), lambda b: (0, 0)),
            pl.BlockSpec((1, F_PACK), lambda b: (0, 0)),
            pl.BlockSpec((l_pad, F_PACK), lambda b: (0, 0)),
            pl.BlockSpec((F_PACK, OUT_PAD), lambda b: (0, 0)),
            pl.BlockSpec((1, OUT_PAD), lambda b: (0, 0)),
        ],
        out_specs=pl.BlockSpec((batch_tile, OUT_PAD), lambda b: (b, 0)),
        scratch_shapes=[pltpu.VMEM((batch_tile * l_pad, max_fs * E),
                                   jnp.bfloat16)],
        compiler_params=pltpu.CompilerParams(
            dimension_semantics=("parallel",),
            vmem_limit_bytes=32 * 1024 * 1024),   # well under v7x's 64 MiB
    )(emb, w_conv, b_conv, mask, fc_w, fc_b)

    # Padded batch rows carry ReLU(bias) garbage -> MUST slice them off.
    # Dropout: inference-mode => identity.
    return out[:B, :output_dim]


# ---------------------------------------------------------------------------
# Pure-JAX reference (same bf16-stored weights, f32 math) for validation.
# ---------------------------------------------------------------------------
def textcnn_reference(text, params, filter_sizes, output_dim):
    emb = params["embedding"][text].astype(jnp.float32)        # (B, S, E)
    S = emb.shape[1]
    pooled_all = []
    for i, fs in enumerate(filter_sizes):
        w = params["conv_w"][i].astype(jnp.float32)            # (fs, E, F)
        b = params["conv_b"][i]
        L = S - fs + 1
        scores = jnp.stack(
            [jnp.einsum("bke,kef->bf", emb[:, p:p + fs, :], w)
             for p in range(L)], axis=1)                       # (B, L, F)
        conved = jax.nn.relu(scores + b[None, None, :])
        pooled_all.append(conved.max(axis=1))
    cat = jnp.concatenate(pooled_all, axis=1)                  # (B, n*F)
    return cat @ params["fc_w"].astype(jnp.float32) + params["fc_b"]


# ---------------------------------------------------------------------------
# Deterministic parameter init (bf16 matmul weights, f32 biases)
# ---------------------------------------------------------------------------
def init_params(key, vocab_size, emb_dim, n_filters, filter_sizes, output_dim,
                pad_idx):
    k_emb, k_cw, k_cb, k_fw, k_fb = jax.random.split(key, 5)

    embedding = (0.1 * jax.random.normal(
        k_emb, (vocab_size, emb_dim), jnp.float32)).astype(jnp.bfloat16)
    embedding = embedding.at[pad_idx].set(0)           # padding_idx row is zero

    conv_w, conv_b = [], []
    for i, fs in enumerate(filter_sizes):
        # PyTorch Conv2d weight (F, 1, fs, E) stored here as (fs, E, F) bf16.
        w = 0.05 * jax.random.normal(jax.random.fold_in(k_cw, i),
                                     (fs, emb_dim, n_filters), jnp.float32)
        b = 0.05 * jax.random.normal(jax.random.fold_in(k_cb, i),
                                     (n_filters,), jnp.float32)
        conv_w.append(w.astype(jnp.bfloat16))
        conv_b.append(b)

    # nn.Linear(n*F, OUT) stored as (n*F, OUT) bf16 (input-major).
    fc_w = (0.05 * jax.random.normal(
        k_fw, (len(filter_sizes) * n_filters, output_dim),
        jnp.float32)).astype(jnp.bfloat16)
    fc_b = 0.05 * jax.random.normal(k_fb, (output_dim,), jnp.float32)

    return {"embedding": embedding, "conv_w": conv_w, "conv_b": conv_b,
            "fc_w": fc_w, "fc_b": fc_b}


if __name__ == "__main__":
    # Small TextCNN config consistent with the module's __init__.
    vocab_size = 50
    embedding_dim = 32
    n_filters = 8
    filter_sizes = (3, 4, 5)
    output_dim = 4
    pad_idx = 0
    batch, seq_len = 2, 16

    key = jax.random.PRNGKey(0)
    k_params, k_text = jax.random.split(key)

    params = init_params(k_params, vocab_size, embedding_dim, n_filters,
                         filter_sizes, output_dim, pad_idx)
    text = jax.random.randint(k_text, (batch, seq_len), 0, vocab_size,
                              dtype=jnp.int32)

    out = textcnn_forward(text, params,
                          filter_sizes=filter_sizes, output_dim=output_dim)
    out = jax.block_until_ready(out)

    assert out.shape == (batch, output_dim), out.shape
    assert out.dtype == jnp.float32

    ref = textcnn_reference(text, params, filter_sizes, output_dim)
    assert jnp.allclose(out, ref, atol=1e-2, rtol=1e-2), (out, ref)

    print("KERNEL_OK")
</pallas_src>

<mosaic_0001>
module attributes {stable_mosaic.version = 11 : i64} {
  func.func @textcnn_fused_kernel(%arg0: i32, %arg1: memref<8x24x32xbf16, #tpu.memory_space<vmem>>, %arg2: memref<160x128xbf16, #tpu.memory_space<vmem>>, %arg3: memref<1x128xf32, #tpu.memory_space<vmem>>, %arg4: memref<16x128xf32, #tpu.memory_space<vmem>>, %arg5: memref<128x128xbf16, #tpu.memory_space<vmem>>, %arg6: memref<1x128xf32, #tpu.memory_space<vmem>>, %arg7: memref<8x128xf32, #tpu.memory_space<vmem>>, %arg8: memref<128x160xbf16, #tpu.memory_space<vmem>>) attributes {dimension_semantics = [#tpu.dimension_semantics<parallel>], iteration_bounds = array<i64: 1>, scalar_prefetch = 0 : i64, scratch_operands = 1 : i64, tpu.core_type = #tpu.core_type<tc>, window_params = [{transform_indices = @transform_0, window_bounds = array<i64: 8, 24, 32>}, {pipeline_mode = #tpu.pipeline_mode<synchronous>, transform_indices = @transform_1, window_bounds = array<i64: 160, 128>}, {pipeline_mode = #tpu.pipeline_mode<synchronous>, transform_indices = @transform_2, window_bounds = array<i64: 1, 128>}, {pipeline_mode = #tpu.pipeline_mode<synchronous>, transform_indices = @transform_3, window_bounds = array<i64: 16, 128>}, {pipeline_mode = #tpu.pipeline_mode<synchronous>, transform_indices = @transform_4, window_bounds = array<i64: 128, 128>}, {pipeline_mode = #tpu.pipeline_mode<synchronous>, transform_indices = @transform_5, window_bounds = array<i64: 1, 128>}, {transform_indices = @transform_6, window_bounds = array<i64: 8, 128>}]} {
    %c0 = arith.constant 0 : index
    %c0_0 = arith.constant 0 : index
    %c0_1 = arith.constant 0 : index
    %0 = vector.load %arg1[%c0, %c0_0, %c0_1] : memref<8x24x32xbf16, #tpu.memory_space<vmem>>, vector<8x16x32xbf16>
    %1 = vector.shape_cast %0 : vector<8x16x32xbf16> to vector<128x32xbf16>
    %c0_2 = arith.constant 0 : index
    %c0_3 = arith.constant 0 : index
    %2 = vector.load %arg8[%c0_2, %c0_3] : memref<128x160xbf16, #tpu.memory_space<vmem>>, vector<128x32xbf16>
    tpu.vector_store %arg8[%c0_2, %c0_3], %1 {strides = array<i32>} : memref<128x160xbf16, #tpu.memory_space<vmem>>, vector<128x32xbf16>,
    %c0_4 = arith.constant 0 : index
    %c1 = arith.constant 1 : index
    %c0_5 = arith.constant 0 : index
    %3 = vector.load %arg1[%c0_4, %c1, %c0_5] : memref<8x24x32xbf16, #tpu.memory_space<vmem>>, vector<8x16x32xbf16>
    %4 = vector.shape_cast %3 : vector<8x16x32xbf16> to vector<128x32xbf16>
    %c0_6 = arith.constant 0 : index
    %c32 = arith.constant 32 : index
    %5 = vector.load %arg8[%c0_6, %c32] : memref<128x160xbf16, #tpu.memory_space<vmem>>, vector<128x32xbf16>
    tpu.vector_store %arg8[%c0_6, %c32], %4 {strides = array<i32>} : memref<128x160xbf16, #tpu.memory_space<vmem>>, vector<128x32xbf16>,
    %c0_7 = arith.constant 0 : index
    %c2 = arith.constant 2 : index
    %c0_8 = arith.constant 0 : index
    %6 = vector.load %arg1[%c0_7, %c2, %c0_8] : memref<8x24x32xbf16, #tpu.memory_space<vmem>>, vector<8x16x32xbf16>
    %7 = vector.shape_cast %6 : vector<8x16x32xbf16> to vector<128x32xbf16>
    %c0_9 = arith.constant 0 : index
    %c64 = arith.constant 64 : index
    %8 = vector.load %arg8[%c0_9, %c64] : memref<128x160xbf16, #tpu.memory_space<vmem>>, vector<128x32xbf16>
    tpu.vector_store %arg8[%c0_9, %c64], %7 {strides = array<i32>} : memref<128x160xbf16, #tpu.memory_space<vmem>>, vector<128x32xbf16>,
    %c0_10 = arith.constant 0 : index
    %c3 = arith.constant 3 : index
    %c0_11 = arith.constant 0 : index
    %9 = vector.load %arg1[%c0_10, %c3, %c0_11] : memref<8x24x32xbf16, #tpu.memory_space<vmem>>, vector<8x16x32xbf16>
    %10 = vector.shape_cast %9 : vector<8x16x32xbf16> to vector<128x32xbf16>
    %c0_12 = arith.constant 0 : index
    %c96 = arith.constant 96 : index
    %11 = vector.load %arg8[%c0_12, %c96] : memref<128x160xbf16, #tpu.memory_space<vmem>>, vector<128x32xbf16>
    tpu.vector_store %arg8[%c0_12, %c96], %10 {strides = array<i32>} : memref<128x160xbf16, #tpu.memory_space<vmem>>, vector<128x32xbf16>,
    %c0_13 = arith.constant 0 : index
    %c4 = arith.constant 4 : index
    %c0_14 = arith.constant 0 : index
    %12 = vector.load %arg1[%c0_13, %c4, %c0_14] : memref<8x24x32xbf16, #tpu.memory_space<vmem>>, vector<8x16x32xbf16>
    %13 = vector.shape_cast %12 : vector<8x16x32xbf16> to vector<128x32xbf16>
    %c0_15 = arith.constant 0 : index
    %c128 = arith.constant 128 : index
    %14 = vector.load %arg8[%c0_15, %c128] : memref<128x160xbf16, #tpu.memory_space<vmem>>, vector<128x32xbf16>
    tpu.vector_store %arg8[%c0_15, %c128], %13 {strides = array<i32>} : memref<128x160xbf16, #tpu.memory_space<vmem>>, vector<128x32xbf16>,
    %c0_16 = arith.constant 0 : index
    %c0_17 = arith.constant 0 : index
    %15 = vector.load %arg8[%c0_16, %c0_17] : memref<128x160xbf16, #tpu.memory_space<vmem>>, vector<128x160xbf16>
    %c0_18 = arith.constant 0 : index
    %c0_19 = arith.constant 0 : index
    %16 = vector.load %arg2[%c0_18, %c0_19] : memref<160x128xbf16, #tpu.memory_space<vmem>>, vector<160x128xbf16>
    %cst = arith.constant dense<0.000000e+00> : vector<128x128xf32>
    %17 = tpu.matmul %15, %16, %cst {dimension_numbers = #tpu.dot_dimension_numbers<[1], [0], [0], [1], [0, 0, 1, 1], [], []>} : vector<128x160xbf16>, vector<160x128xbf16>, vector<128x128xf32> -> vector<128x128xf32>
    %18 = vector.shape_cast %17 : vector<128x128xf32> to vector<8x16x128xf32>
    %c0_20 = arith.constant 0 : index
    %c0_21 = arith.constant 0 : index
    %19 = vector.load %arg4[%c0_20, %c0_21] : memref<16x128xf32, #tpu.memory_space<vmem>>, vector<16x128xf32>
    %20 = vector.shape_cast %19 : vector<16x128xf32> to vector<1x16x128xf32>
    %21 = vector.broadcast %20 : vector<1x16x128xf32> to vector<8x16x128xf32>
    %22 = arith.addf %18, %21 : vector<8x16x128xf32>
    %cst_22 = arith.constant dense<0xFF800000> : vector<8x128xf32>
    %23 = vector.multi_reduction <maximumf>, %22, %cst_22 [1] : vector<8x16x128xf32> to vector<8x128xf32>
    %c0_23 = arith.constant 0 : index
    %c0_24 = arith.constant 0 : index
    %24 = vector.load %arg3[%c0_23, %c0_24] : memref<1x128xf32, #tpu.memory_space<vmem>>, vector<1x128xf32>
    %25 = vector.broadcast %24 : vector<1x128xf32> to vector<8x128xf32>
    %26 = arith.addf %23, %25 : vector<8x128xf32>
    %cst_25 = arith.constant 0.000000e+00 : f32
    %27 = vector.broadcast %cst_25 : f32 to vector<8x128xf32>
    %28 = arith.maximumf %26, %27 : vector<8x128xf32>
    %29 = arith.truncf %28 : vector<8x128xf32> to vector<8x128xbf16>
    %c0_26 = arith.constant 0 : index
    %c0_27 = arith.constant 0 : index
    %30 = vector.load %arg5[%c0_26, %c0_27] : memref<128x128xbf16, #tpu.memory_space<vmem>>, vector<128x128xbf16>
    %cst_28 = arith.constant dense<0.000000e+00> : vector<8x128xf32>
    %31 = tpu.matmul %29, %30, %cst_28 {dimension_numbers = #tpu.dot_dimension_numbers<[1], [0], [0], [1], [0, 0, 1, 1], [], []>} : vector<8x128xbf16>, vector<128x128xbf16>, vector<8x128xf32> -> vector<8x128xf32>
    %c0_29 = arith.constant 0 : index
    %c0_30 = arith.constant 0 : index
    %32 = vector.load %arg6[%c0_29, %c0_30] : memref<1x128xf32, #tpu.memory_space<vmem>>, vector<1x128xf32>
    %33 = vector.broadcast %32 : vector<1x128xf32> to vector<8x128xf32>
    %34 = arith.addf %31, %33 : vector<8x128xf32>
    %c0_31 = arith.constant 0 : index
    %c0_32 = arith.constant 0 : index
    %35 = vector.load %arg7[%c0_31, %c0_32] : memref<8x128xf32, #tpu.memory_space<vmem>>, vector<8x128xf32>
    tpu.vector_store %arg7[%c0_31, %c0_32], %34 {strides = array<i32>} : memref<8x128xf32, #tpu.memory_space<vmem>>, vector<8x128xf32>,
    return
  }
  func.func @transform_0(%arg0: i32) -> (i32, i32, i32) {
    %c0_i32 = arith.constant 0 : i32
    %c0_i32_0 = arith.constant 0 : i32
    %c0_i32_1 = arith.constant 0 : i32
    return %arg0, %c0_i32, %c0_i32_0 : i32, i32, i32
  }
  func.func @transform_1(%arg0: i32) -> (i32, i32) {
    %c0_i32 = arith.constant 0 : i32
    %c0_i32_0 = arith.constant 0 : i32
    %c0_i32_1 = arith.constant 0 : i32
    return %c0_i32, %c0_i32_0 : i32, i32
  }
  func.func @transform_2(%arg0: i32) -> (i32, i32) {
    %c0_i32 = arith.constant 0 : i32
    %c0_i32_0 = arith.constant 0 : i32
    %c0_i32_1 = arith.constant 0 : i32
    return %c0_i32, %c0_i32_0 : i32, i32
  }
  func.func @transform_3(%arg0: i32) -> (i32, i32) {
    %c0_i32 = arith.constant 0 : i32
    %c0_i32_0 = arith.constant 0 : i32
    %c0_i32_1 = arith.constant 0 : i32
    return %c0_i32, %c0_i32_0 : i32, i32
  }
  func.func @transform_4(%arg0: i32) -> (i32, i32) {
    %c0_i32 = arith.constant 0 : i32
    %c0_i32_0 = arith.constant 0 : i32
    %c0_i32_1 = arith.constant 0 : i32
    return %c0_i32, %c0_i32_0 : i32, i32
  }
  func.func @transform_5(%arg0: i32) -> (i32, i32) {
    %c0_i32 = arith.constant 0 : i32
    %c0_i32_0 = arith.constant 0 : i32
    %c0_i32_1 = arith.constant 0 : i32
    return %c0_i32, %c0_i32_0 : i32, i32
  }
  func.func @transform_6(%arg0: i32) -> (i32, i32) {
    %c0_i32 = arith.constant 0 : i32
    %c0_i32_0 = arith.constant 0 : i32
    return %arg0, %c0_i32 : i32, i32
  }
}

</mosaic_0001>

<llo_original>
// kernel: textcnn_forward.1
$region0: #{textcnn_forward.1}
  #allocation0 [shape = 'u32[]', space=smem, size = 0x4, offset = 0x4, fixed_abs, tag = 'smem constant byte address 0x4 - core index']
  #allocation1 [shape = 'u32[144,128]{1,0:T(1,128)}', space=vmem, size = 0x12000, scoped, tag = 'internal scratch']
  #allocation2 [shape = 'bf16[128,160]{1,0:T(8,128)(2,1)}', space=vmem, size = 0x10000, scoped, tag = 'scratch operand']
  %s0 = inlined_call_operand.vmem [shape: bf16[8,24,32], index: 0, kind: input, shape index: {}]
  %s1 = inlined_call_operand.vmem [shape: bf16[160,128], index: 1, kind: input, shape index: {}]
  %s2 = inlined_call_operand.vmem [shape: f32[1,128], index: 2, kind: input, shape index: {}]
  %s3 = inlined_call_operand.vmem [shape: f32[16,128], index: 3, kind: input, shape index: {}]
  %s4 = inlined_call_operand.vmem [shape: bf16[128,128], index: 4, kind: input, shape index: {}]
  %s5 = inlined_call_operand.vmem [shape: f32[1,128], index: 5, kind: input, shape index: {}]
  %s6 = inlined_call_operand.vmem [shape: f32[8,128], index: 6, kind: output, shape index: {}]
  %s7 = sld [smem:[#allocation0]]
  $region34: #{textcnn_forward.1} parent=0
    _
  %s9 = ssub.s32 1, %s7
  %s10 = scalar_select 0, %s9, %s7
  // Predicated region
  $region2: #{textcnn_forward.1} parent=0 // pred_check
    _
  $region3: #{textcnn_forward.1} parent=0 // pred_check_branch
    %12 = sbr.rel (0) target = $region5
  $region4: #{textcnn_forward.1} parent=0 // pred_region
    _
  $region5: #{textcnn_forward.1} parent=0 // pred_fallthru
    _
  // Predicated region
  $region6: #{textcnn_forward.1} parent=0 // pred_check
    _
  $region7: #{textcnn_forward.1} parent=0 // pred_check_branch
    %14 = sbr.rel (0) target = $region9
  $region8: #{textcnn_forward.1} parent=0 // pred_region
    _
  $region9: #{textcnn_forward.1} parent=0 // pred_fallthru
    _
  // Predicated region
  $region10: #{textcnn_forward.1} parent=0 // pred_check
    _
  $region11: #{textcnn_forward.1} parent=0 // pred_check_branch
    %16 = sbr.rel (0) target = $region13
  $region12: #{textcnn_forward.1} parent=0 // pred_region
    _
  $region13: #{textcnn_forward.1} parent=0 // pred_fallthru
    _
  // Predicated region
  $region14: #{textcnn_forward.1} parent=0 // pred_check
    _
  $region15: #{textcnn_forward.1} parent=0 // pred_check_branch
    %18 = sbr.rel (0) target = $region17
  $region16: #{textcnn_forward.1} parent=0 // pred_region
    _
  $region17: #{textcnn_forward.1} parent=0 // pred_fallthru
    _
  // Predicated region
  $region18: #{textcnn_forward.1} parent=0 // pred_check
    _
  $region19: #{textcnn_forward.1} parent=0 // pred_check_branch
    %20 = sbr.rel (0) target = $region21
  $region20: #{textcnn_forward.1} parent=0 // pred_region
    _
  $region21: #{textcnn_forward.1} parent=0 // pred_fallthru
    _
  // Predicated region
  $region22: #{textcnn_forward.1} parent=0 // pred_check
    _
  $region23: #{textcnn_forward.1} parent=0 // pred_check_branch
    %22 = sbr.rel (0) target = $region25
  $region24: #{textcnn_forward.1} parent=0 // pred_region
    _
  $region25: #{textcnn_forward.1} parent=0 // pred_fallthru
    _
  %v24 = vld [vmem:[%s0] sm:$0xf]
  %v25 = vld [vmem:[%s0 + $0x4] sm:$0xf]
  %v26 = vld [vmem:[%s0 + $0xc] sm:$0xf]
  %v27 = vld [vmem:[%s0 + $0x10] sm:$0xf]
  %v28 = vld [vmem:[%s0 + $0x18] sm:$0xf]
  %v29 = vld [vmem:[%s0 + $0x1c] sm:$0xf]
  %v30 = vld [vmem:[%s0 + $0x24] sm:$0xf]
  %v31 = vld [vmem:[%s0 + $0x28] sm:$0xf]
  %v32 = vld [vmem:[%s0 + $0x30] sm:$0xf]
  %v33 = vld [vmem:[%s0 + $0x34] sm:$0xf]
  %v34 = vld [vmem:[%s0 + $0x3c] sm:$0xf]
  %v35 = vld [vmem:[%s0 + $0x40] sm:$0xf]
  %v36 = vld [vmem:[%s0 + $0x48] sm:$0xf]
  %v37 = vld [vmem:[%s0 + $0x4c] sm:$0xf]
  %v38 = vld [vmem:[%s0 + $0x54] sm:$0xf]
  %v39 = vld [vmem:[%s0 + $0x58] sm:$0xf]
  %vm40 = vcmask 257024
  %41 = vst.msk [vmem:[#allocation2] sm:$0xf] %vm40, %v24
  %42 = vst.msk [vmem:[#allocation2 + $0x8] sm:$0xf] %vm40, %v25
  %43 = vst.msk [vmem:[#allocation2 + $0x10] sm:$0xf] %vm40, %v26
  %44 = vst.msk [vmem:[#allocation2 + $0x18] sm:$0xf] %vm40, %v27
  %45 = vst.msk [vmem:[#allocation2 + $0x20] sm:$0xf] %vm40, %v28
  %46 = vst.msk [vmem:[#allocation2 + $0x28] sm:$0xf] %vm40, %v29
  %47 = vst.msk [vmem:[#allocation2 + $0x30] sm:$0xf] %vm40, %v30
  %48 = vst.msk [vmem:[#allocation2 + $0x38] sm:$0xf] %vm40, %v31
  %49 = vst.msk [vmem:[#allocation2 + $0x40] sm:$0xf] %vm40, %v32
  %50 = vst.msk [vmem:[#allocation2 + $0x48] sm:$0xf] %vm40, %v33
  %51 = vst.msk [vmem:[#allocation2 + $0x50] sm:$0xf] %vm40, %v34
  %52 = vst.msk [vmem:[#allocation2 + $0x58] sm:$0xf] %vm40, %v35
  %53 = vst.msk [vmem:[#allocation2 + $0x60] sm:$0xf] %vm40, %v36
  %54 = vst.msk [vmem:[#allocation2 + $0x68] sm:$0xf] %vm40, %v37
  %55 = vst.msk [vmem:[#allocation2 + $0x70] sm:$0xf] %vm40, %v38
  %56 = vst.msk [vmem:[#allocation2 + $0x78] sm:$0xf] %vm40, %v39
  %v57 = vld [vmem:[%s0] sm:$0xf]
  %v58 = vld [vmem:[%s0 + $0x4] sm:$0xf]
  %v59 = vld [vmem:[%s0 + $0x8] sm:$0x1]
  %v60 = vld [vmem:[%s0 + $0xc] sm:$0xf]
  %v61 = vld [vmem:[%s0 + $0x10] sm:$0xf]
  %v62 = vld [vmem:[%s0 + $0x14] sm:$0x1]
  %v63 = vld [vmem:[%s0 + $0x18] sm:$0xf]
  %v64 = vld [vmem:[%s0 + $0x1c] sm:$0xf]
  %v65 = vld [vmem:[%s0 + $0x20] sm:$0x1]
  %v66 = vld [vmem:[%s0 + $0x24] sm:$0xf]
  %v67 = vld [vmem:[%s0 + $0x28] sm:$0xf]
  %v68 = vld [vmem:[%s0 + $0x2c] sm:$0x1]
  %v69 = vld [vmem:[%s0 + $0x30] sm:$0xf]
  %v70 = vld [vmem:[%s0 + $0x34] sm:$0xf]
  %v71 = vld [vmem:[%s0 + $0x38] sm:$0x1]
  %v72 = vld [vmem:[%s0 + $0x3c] sm:$0xf]
  %v73 = vld [vmem:[%s0 + $0x40] sm:$0xf]
  %v74 = vld [vmem:[%s0 + $0x44] sm:$0x1]
  %v75 = vld [vmem:[%s0 + $0x48] sm:$0xf]
  %v76 = vld [vmem:[%s0 + $0x4c] sm:$0xf]
  %v77 = vld [vmem:[%s0 + $0x50] sm:$0x1]
  %v78 = vld [vmem:[%s0 + $0x54] sm:$0xf]
  %v79 = vld [vmem:[%s0 + $0x58] sm:$0xf]
  %v80 = vld [vmem:[%s0 + $0x5c] sm:$0x1]
  %vm81 = vsmask.f32 3328
  %vm82 = vsmask.f32 7440
  %vm83 = vmor %vm81, %vm82
  %v85 = vshrl.u32 %v57, 16
  %v87 = vrot.slane %v85, 4
  %v88 = vshll.u32 %v57, 16
  %v90 = vrot.slane %v88, 5
  %v91 = vor.u32 %v87, %v90
  %v92 = vrot.slane %v91, 4
  %v94 = vshll.u32 %v58, 16
  %v96 = vrot.slane %v94, 5
  %v97 = vsel %vm83, %v92, %v96
  %v98 = vshrl.u32 %v58, 16
  %v100 = vrot.slane %v98, 4
  %v101 = vor.u32 %v100, %v96
  %v102 = vrot.slane %v101, 4
  %v104 = vshll.u32 %v59, 16
  %v106 = vrot.slane %v104, 5
  %v107 = vsel %vm83, %v102, %v106
  %v109 = vshrl.u32 %v60, 16
  %v111 = vrot.slane %v109, 4
  %v112 = vshll.u32 %v60, 16
  %v114 = vrot.slane %v112, 5
  %v115 = vor.u32 %v111, %v114
  %v116 = vrot.slane %v115, 4
  %v118 = vshll.u32 %v61, 16
  %v120 = vrot.slane %v118, 5
  %v121 = vsel %vm83, %v116, %v120
  %v122 = vshrl.u32 %v61, 16
  %v124 = vrot.slane %v122, 4
  %v125 = vor.u32 %v124, %v120
  %v126 = vrot.slane %v125, 4
  %v128 = vshll.u32 %v62, 16
  %v130 = vrot.slane %v128, 5
  %v131 = vsel %vm83, %v126, %v130
  %v133 = vshrl.u32 %v63, 16
  %v135 = vrot.slane %v133, 4
  %v136 = vshll.u32 %v63, 16
  %v138 = vrot.slane %v136, 5
  %v139 = vor.u32 %v135, %v138
  %v140 = vrot.slane %v139, 4
  %v142 = vshll.u32 %v64, 16
  %v144 = vrot.slane %v142, 5
  %v145 = vsel %vm83, %v140, %v144
  %v146 = vshrl.u32 %v64, 16
  %v148 = vrot.slane %v146, 4
  %v149 = vor.u32 %v148, %v144
  %v150 = vrot.slane %v149, 4
  %v152 = vshll.u32 %v65, 16
  %v154 = vrot.slane %v152, 5
  %v155 = vsel %vm83, %v150, %v154
  %v157 = vshrl.u32 %v66, 16
  %v159 = vrot.slane %v157, 4
  %v160 = vshll.u32 %v66, 16
  %v162 = vrot.slane %v160, 5
  %v163 = vor.u32 %v159, %v162
  %v164 = vrot.slane %v163, 4
  %v166 = vshll.u32 %v67, 16
  %v168 = vrot.slane %v166, 5
  %v169 = vsel %vm83, %v164, %v168
  %v170 = vshrl.u32 %v67, 16
  %v172 = vrot.slane %v170, 4
  %v173 = vor.u32 %v172, %v168
  %v174 = vrot.slane %v173, 4
  %v176 = vshll.u32 %v68, 16
  %v178 = vrot.slane %v176, 5
  %v179 = vsel %vm83, %v174, %v178
  %v181 = vshrl.u32 %v69, 16
  %v183 = vrot.slane %v181, 4
  %v184 = vshll.u32 %v69, 16
  %v186 = vrot.slane %v184, 5
  %v187 = vor.u32 %v183, %v186
  %v188 = vrot.slane %v187, 4
  %v190 = vshll.u32 %v70, 16
  %v192 = vrot.slane %v190, 5
  %v193 = vsel %vm83, %v188, %v192
  %v194 = vshrl.u32 %v70, 16
  %v196 = vrot.slane %v194, 4
  %v197 = vor.u32 %v196, %v192
  %v198 = vrot.slane %v197, 4
  %v200 = vshll.u32 %v71, 16
  %v202 = vrot.slane %v200, 5
  %v203 = vsel %vm83, %v198, %v202
  %v205 = vshrl.u32 %v72, 16
  %v207 = vrot.slane %v205, 4
  %v208 = vshll.u32 %v72, 16
  %v210 = vrot.slane %v208, 5
  %v211 = vor.u32 %v207, %v210
  %v212 = vrot.slane %v211, 4
  %v214 = vshll.u32 %v73, 16
  %v216 = vrot.slane %v214, 5
  %v217 = vsel %vm83, %v212, %v216
  %v218 = vshrl.u32 %v73, 16
  %v220 = vrot.slane %v218, 4
  %v221 = vor.u32 %v220, %v216
  %v222 = vrot.slane %v221, 4
  %v224 = vshll.u32 %v74, 16
  %v226 = vrot.slane %v224, 5
  %v227 = vsel %vm83, %v222, %v226
  %v229 = vshrl.u32 %v75, 16
  %v231 = vrot.slane %v229, 4
  %v232 = vshll.u32 %v75, 16
  %v234 = vrot.slane %v232, 5
  %v235 = vor.u32 %v231, %v234
  %v236 = vrot.slane %v235, 4
  %v238 = vshll.u32 %v76, 16
  %v240 = vrot.slane %v238, 5
  %v241 = vsel %vm83, %v236, %v240
  %v242 = vshrl.u32 %v76, 16
  %v244 = vrot.slane %v242, 4
  %v245 = vor.u32 %v244, %v240
  %v246 = vrot.slane %v245, 4
  %v248 = vshll.u32 %v77, 16
  %v250 = vrot.slane %v248, 5
  %v251 = vsel %vm83, %v246, %v250
  %v253 = vshrl.u32 %v78, 16
  %v255 = vrot.slane %v253, 4
  %v256 = vshll.u32 %v78, 16
  %v258 = vrot.slane %v256, 5
  %v259 = vor.u32 %v255, %v258
  %v260 = vrot.slane %v259, 4
  %v262 = vshll.u32 %v79, 16
  %v264 = vrot.slane %v262, 5
  %v265 = vsel %vm83, %v260, %v264
  %v266 = vshrl.u32 %v79, 16
  %v268 = vrot.slane %v266, 4
  %v269 = vor.u32 %v268, %v264
  %v270 = vrot.slane %v269, 4
  %v272 = vshll.u32 %v80, 16
  %v274 = vrot.slane %v272, 5
  %v275 = vsel %vm83, %v270, %v274
  %276 = vrot.lane.b32.xlu0 %v97, 32
  %v277 = vpop.permute.xlu0 %276
  %278 = vrot.lane.b32.xlu0 %v107, 32
  %v279 = vpop.permute.xlu0 %278
  %280 = vrot.lane.b32.xlu0 %v121, 32
  %v281 = vpop.permute.xlu0 %280
  %282 = vrot.lane.b32.xlu0 %v131, 32
  %v283 = vpop.permute.xlu0 %282
  %284 = vrot.lane.b32.xlu0 %v145, 32
  %v285 = vpop.permute.xlu0 %284
  %286 = vrot.lane.b32.xlu0 %v155, 32
  %v287 = vpop.permute.xlu0 %286
  %288 = vrot.lane.b32.xlu0 %v169, 32
  %v289 = vpop.permute.xlu0 %288
  %290 = vrot.lane.b32.xlu0 %v179, 32
  %v291 = vpop.permute.xlu0 %290
  %292 = vrot.lane.b32.xlu0 %v193, 32
  %v293 = vpop.permute.xlu0 %292
  %294 = vrot.lane.b32.xlu0 %v203, 32
  %v295 = vpop.permute.xlu0 %294
  %296 = vrot.lane.b32.xlu0 %v217, 32
  %v297 = vpop.permute.xlu0 %296
  %298 = vrot.lane.b32.xlu0 %v227, 32
  %v299 = vpop.permute.xlu0 %298
  %300 = vrot.lane.b32.xlu0 %v241, 32
  %v301 = vpop.permute.xlu0 %300
  %302 = vrot.lane.b32.xlu0 %v251, 32
  %v303 = vpop.permute.xlu0 %302
  %304 = vrot.lane.b32.xlu0 %v265, 32
  %v305 = vpop.permute.xlu0 %304
  %306 = vrot.lane.b32.xlu0 %v275, 32
  %v307 = vpop.permute.xlu0 %306
  %vm324 = vcmask 519424
  %325 = vst.msk [vmem:[#allocation2] sm:$0xf] %vm324, %v277
  %326 = vst.msk [vmem:[#allocation2 + $0x8] sm:$0xf] %vm324, %v279
  %327 = vst.msk [vmem:[#allocation2 + $0x10] sm:$0xf] %vm324, %v281
  %328 = vst.msk [vmem:[#allocation2 + $0x18] sm:$0xf] %vm324, %v283
  %329 = vst.msk [vmem:[#allocation2 + $0x20] sm:$0xf] %vm324, %v285
  %330 = vst.msk [vmem:[#allocation2 + $0x28] sm:$0xf] %vm324, %v287
  %331 = vst.msk [vmem:[#allocation2 + $0x30] sm:$0xf] %vm324, %v289
  %332 = vst.msk [vmem:[#allocation2 + $0x38] sm:$0xf] %vm324, %v291
  %333 = vst.msk [vmem:[#allocation2 + $0x40] sm:$0xf] %vm324, %v293
  %334 = vst.msk [vmem:[#allocation2 + $0x48] sm:$0xf] %vm324, %v295
  %335 = vst.msk [vmem:[#allocation2 + $0x50] sm:$0xf] %vm324, %v297
  %336 = vst.msk [vmem:[#allocation2 + $0x58] sm:$0xf] %vm324, %v299
  %337 = vst.msk [vmem:[#allocation2 + $0x60] sm:$0xf] %vm324, %v301
  %338 = vst.msk [vmem:[#allocation2 + $0x68] sm:$0xf] %vm324, %v303
  %339 = vst.msk [vmem:[#allocation2 + $0x70] sm:$0xf] %vm324, %v305
  %340 = vst.msk [vmem:[#allocation2 + $0x78] sm:$0xf] %vm324, %v307
  %v341 = vld [vmem:[%s0] sm:$0xe]
  %v342 = vld [vmem:[%s0 + $0x4] sm:$0xf]
  %v343 = vld [vmem:[%s0 + $0x8] sm:$0x1]
  %v344 = vld [vmem:[%s0 + $0xc] sm:$0xe]
  %v345 = vld [vmem:[%s0 + $0x10] sm:$0xf]
  %v346 = vld [vmem:[%s0 + $0x14] sm:$0x1]
  %v347 = vld [vmem:[%s0 + $0x18] sm:$0xe]
  %v348 = vld [vmem:[%s0 + $0x1c] sm:$0xf]
  %v349 = vld [vmem:[%s0 + $0x20] sm:$0x1]
  %v350 = vld [vmem:[%s0 + $0x24] sm:$0xe]
  %v351 = vld [vmem:[%s0 + $0x28] sm:$0xf]
  %v352 = vld [vmem:[%s0 + $0x2c] sm:$0x1]
  %v353 = vld [vmem:[%s0 + $0x30] sm:$0xe]
  %v354 = vld [vmem:[%s0 + $0x34] sm:$0xf]
  %v355 = vld [vmem:[%s0 + $0x38] sm:$0x1]
  %v356 = vld [vmem:[%s0 + $0x3c] sm:$0xe]
  %v357 = vld [vmem:[%s0 + $0x40] sm:$0xf]
  %v358 = vld [vmem:[%s0 + $0x44] sm:$0x1]
  %v359 = vld [vmem:[%s0 + $0x48] sm:$0xe]
  %v360 = vld [vmem:[%s0 + $0x4c] sm:$0xf]
  %v361 = vld [vmem:[%s0 + $0x50] sm:$0x1]
  %v362 = vld [vmem:[%s0 + $0x54] sm:$0xe]
  %v363 = vld [vmem:[%s0 + $0x58] sm:$0xf]
  %v364 = vld [vmem:[%s0 + $0x5c] sm:$0x1]
  %vm389 = vcmask 1042432
  %vm390 = vcmask 1046532
  %vm391 = vmor %vm389, %vm390
  %v392 = vrot.slane %v341, 5
  %v393 = vrot.slane %v392, 4
  %v394 = vrot.slane %v342, 5
  %v395 = vsel %vm391, %v393, %v394
  %v396 = vrot.slane %v394, 4
  %v397 = vrot.slane %v343, 5
  %v398 = vsel %vm391, %v396, %v397
  %v399 = vrot.slane %v344, 5
  %v400 = vrot.slane %v399, 4
  %v401 = vrot.slane %v345, 5
  %v402 = vsel %vm391, %v400, %v401
  %v403 = vrot.slane %v401, 4
  %v404 = vrot.slane %v346, 5
  %v405 = vsel %vm391, %v403, %v404
  %v406 = vrot.slane %v347, 5
  %v407 = vrot.slane %v406, 4
  %v408 = vrot.slane %v348, 5
  %v409 = vsel %vm391, %v407, %v408
  %v410 = vrot.slane %v408, 4
  %v411 = vrot.slane %v349, 5
  %v412 = vsel %vm391, %v410, %v411
  %v413 = vrot.slane %v350, 5
  %v414 = vrot.slane %v413, 4
  %v415 = vrot.slane %v351, 5
  %v416 = vsel %vm391, %v414, %v415
  %v417 = vrot.slane %v415, 4
  %v418 = vrot.slane %v352, 5
  %v419 = vsel %vm391, %v417, %v418
  %v420 = vrot.slane %v353, 5
  %v421 = vrot.slane %v420, 4
  %v422 = vrot.slane %v354, 5
  %v423 = vsel %vm391, %v421, %v422
  %v424 = vrot.slane %v422, 4
  %v425 = vrot.slane %v355, 5
  %v426 = vsel %vm391, %v424, %v425
  %v427 = vrot.slane %v356, 5
  %v428 = vrot.slane %v427, 4
  %v429 = vrot.slane %v357, 5
  %v430 = vsel %vm391, %v428, %v429
  %v431 = vrot.slane %v429, 4
  %v432 = vrot.slane %v358, 5
  %v433 = vsel %vm391, %v431, %v432
  %v434 = vrot.slane %v359, 5
  %v435 = vrot.slane %v434, 4
  %v436 = vrot.slane %v360, 5
  %v437 = vsel %vm391, %v435, %v436
  %v438 = vrot.slane %v436, 4
  %v439 = vrot.slane %v361, 5
  %v440 = vsel %vm391, %v438, %v439
  %v441 = vrot.slane %v362, 5
  %v442 = vrot.slane %v441, 4
  %v443 = vrot.slane %v363, 5
  %v444 = vsel %vm391, %v442, %v443
  %v445 = vrot.slane %v443, 4
  %v446 = vrot.slane %v364, 5
  %v447 = vsel %vm391, %v445, %v446
  %448 = vrot.lane.b32.xlu0 %v395, 64
  %v449 = vpop.permute.xlu0 %448
  %450 = vrot.lane.b32.xlu0 %v398, 64
  %v451 = vpop.permute.xlu0 %450
  %452 = vrot.lane.b32.xlu0 %v402, 64
  %v453 = vpop.permute.xlu0 %452
  %454 = vrot.lane.b32.xlu0 %v405, 64
  %v455 = vpop.permute.xlu0 %454
  %456 = vrot.lane.b32.xlu0 %v409, 64
  %v457 = vpop.permute.xlu0 %456
  %458 = vrot.lane.b32.xlu0 %v412, 64
  %v459 = vpop.permute.xlu0 %458
  %460 = vrot.lane.b32.xlu0 %v416, 64
  %v461 = vpop.permute.xlu0 %460
  %462 = vrot.lane.b32.xlu0 %v419, 64
  %v463 = vpop.permute.xlu0 %462
  %464 = vrot.lane.b32.xlu0 %v423, 64
  %v465 = vpop.permute.xlu0 %464
  %466 = vrot.lane.b32.xlu0 %v426, 64
  %v467 = vpop.permute.xlu0 %466
  %468 = vrot.lane.b32.xlu0 %v430, 64
  %v469 = vpop.permute.xlu0 %468
  %470 = vrot.lane.b32.xlu0 %v433, 64
  %v471 = vpop.permute.xlu0 %470
  %472 = vrot.lane.b32.xlu0 %v437, 64
  %v473 = vpop.permute.xlu0 %472
  %474 = vrot.lane.b32.xlu0 %v440, 64
  %v475 = vpop.permute.xlu0 %474
  %476 = vrot.lane.b32.xlu0 %v444, 64
  %v477 = vpop.permute.xlu0 %476
  %478 = vrot.lane.b32.xlu0 %v447, 64
  %v479 = vpop.permute.xlu0 %478
  %vm496 = vcmask 781824
  %497 = vst.msk [vmem:[#allocation2] sm:$0xf] %vm496, %v449
  %498 = vst.msk [vmem:[#allocation2 + $0x8] sm:$0xf] %vm496, %v451
  %499 = vst.msk [vmem:[#allocation2 + $0x10] sm:$0xf] %vm496, %v453
  %500 = vst.msk [vmem:[#allocation2 + $0x18] sm:$0xf] %vm496, %v455
  %501 = vst.msk [vmem:[#allocation2 + $0x20] sm:$0xf] %vm496, %v457
  %502 = vst.msk [vmem:[#allocation2 + $0x28] sm:$0xf] %vm496, %v459
  %503 = vst.msk [vmem:[#allocation2 + $0x30] sm:$0xf] %vm496, %v461
  %504 = vst.msk [vmem:[#allocation2 + $0x38] sm:$0xf] %vm496, %v463
  %505 = vst.msk [vmem:[#allocation2 + $0x40] sm:$0xf] %vm496, %v465
  %506 = vst.msk [vmem:[#allocation2 + $0x48] sm:$0xf] %vm496, %v467
  %507 = vst.msk [vmem:[#allocation2 + $0x50] sm:$0xf] %vm496, %v469
  %508 = vst.msk [vmem:[#allocation2 + $0x58] sm:$0xf] %vm496, %v471
  %509 = vst.msk [vmem:[#allocation2 + $0x60] sm:$0xf] %vm496, %v473
  %510 = vst.msk [vmem:[#allocation2 + $0x68] sm:$0xf] %vm496, %v475
  %511 = vst.msk [vmem:[#allocation2 + $0x70] sm:$0xf] %vm496, %v477
  %512 = vst.msk [vmem:[#allocation2 + $0x78] sm:$0xf] %vm496, %v479
  %v513 = vld [vmem:[%s0] sm:$0xe]
  %v514 = vld [vmem:[%s0 + $0x4] sm:$0xf]
  %v515 = vld [vmem:[%s0 + $0x8] sm:$0x3]
  %v516 = vld [vmem:[%s0 + $0xc] sm:$0xe]
  %v517 = vld [vmem:[%s0 + $0x10] sm:$0xf]
  %v518 = vld [vmem:[%s0 + $0x14] sm:$0x3]
  %v519 = vld [vmem:[%s0 + $0x18] sm:$0xe]
  %v520 = vld [vmem:[%s0 + $0x1c] sm:$0xf]
  %v521 = vld [vmem:[%s0 + $0x20] sm:$0x3]
  %v522 = vld [vmem:[%s0 + $0x24] sm:$0xe]
  %v523 = vld [vmem:[%s0 + $0x28] sm:$0xf]
  %v524 = vld [vmem:[%s0 + $0x2c] sm:$0x3]
  %v525 = vld [vmem:[%s0 + $0x30] sm:$0xe]
  %v526 = vld [vmem:[%s0 + $0x34] sm:$0xf]
  %v527 = vld [vmem:[%s0 + $0x38] sm:$0x3]
  %v528 = vld [vmem:[%s0 + $0x3c] sm:$0xe]
  %v529 = vld [vmem:[%s0 + $0x40] sm:$0xf]
  %v530 = vld [vmem:[%s0 + $0x44] sm:$0x3]
  %v531 = vld [vmem:[%s0 + $0x48] sm:$0xe]
  %v532 = vld [vmem:[%s0 + $0x4c] sm:$0xf]
  %v533 = vld [vmem:[%s0 + $0x50] sm:$0x3]
  %v534 = vld [vmem:[%s0 + $0x54] sm:$0xe]
  %v535 = vld [vmem:[%s0 + $0x58] sm:$0xf]
  %v536 = vld [vmem:[%s0 + $0x5c] sm:$0x3]
  %vm537 = vsmask.f32 2304
  %vm538 = vsmask.f32 6416
  %vm539 = vmor %vm537, %vm538
  %v541 = vshrl.u32 %v513, 16
  %v543 = vrot.slane %v541, 5
  %v544 = vshll.u32 %v513, 16
  %v546 = vrot.slane %v544, 6
  %v547 = vor.u32 %v543, %v546
  %v548 = vrot.slane %v547, 4
  %v550 = vshrl.u32 %v514, 16
  %v552 = vrot.slane %v550, 5
  %v553 = vshll.u32 %v514, 16
  %v555 = vrot.slane %v553, 6
  %v556 = vor.u32 %v552, %v555
  %v557 = vsel %vm539, %v548, %v556
  %v558 = vrot.slane %v556, 4
  %v560 = vshrl.u32 %v515, 16
  %v562 = vrot.slane %v560, 5
  %v563 = vshll.u32 %v515, 16
  %v565 = vrot.slane %v563, 6
  %v566 = vor.u32 %v562, %v565
  %v567 = vsel %vm539, %v558, %v566
  %v569 = vshrl.u32 %v516, 16
  %v571 = vrot.slane %v569, 5
  %v572 = vshll.u32 %v516, 16
  %v574 = vrot.slane %v572, 6
  %v575 = vor.u32 %v571, %v574
  %v576 = vrot.slane %v575, 4
  %v578 = vshrl.u32 %v517, 16
  %v580 = vrot.slane %v578, 5
  %v581 = vshll.u32 %v517, 16
  %v583 = vrot.slane %v581, 6
  %v584 = vor.u32 %v580, %v583
  %v585 = vsel %vm539, %v576, %v584
  %v586 = vrot.slane %v584, 4
  %v588 = vshrl.u32 %v518, 16
  %v590 = vrot.slane %v588, 5
  %v591 = vshll.u32 %v518, 16
  %v593 = vrot.slane %v591, 6
  %v594 = vor.u32 %v590, %v593
  %v595 = vsel %vm539, %v586, %v594
  %v597 = vshrl.u32 %v519, 16
  %v599 = vrot.slane %v597, 5
  %v600 = vshll.u32 %v519, 16
  %v602 = vrot.slane %v600, 6
  %v603 = vor.u32 %v599, %v602
  %v604 = vrot.slane %v603, 4
  %v606 = vshrl.u32 %v520, 16
  %v608 = vrot.slane %v606, 5
  %v609 = vshll.u32 %v520, 16
  %v611 = vrot.slane %v609, 6
  %v612 = vor.u32 %v608, %v611
  %v613 = vsel %vm539, %v604, %v612
  %v614 = vrot.slane %v612, 4
  %v616 = vshrl.u32 %v521, 16
  %v618 = vrot.slane %v616, 5
  %v619 = vshll.u32 %v521, 16
  %v621 = vrot.slane %v619, 6
  %v622 = vor.u32 %v618, %v621
  %v623 = vsel %vm539, %v614, %v622
  %v625 = vshrl.u32 %v522, 16
  %v627 = vrot.slane %v625, 5
  %v628 = vshll.u32 %v522, 16
  %v630 = vrot.slane %v628, 6
  %v631 = vor.u32 %v627, %v630
  %v632 = vrot.slane %v631, 4
  %v634 = vshrl.u32 %v523, 16
  %v636 = vrot.slane %v634, 5
  %v637 = vshll.u32 %v523, 16
  %v639 = vrot.slane %v637, 6
  %v640 = vor.u32 %v636, %v639
  %v641 = vsel %vm539, %v632, %v640
  %v642 = vrot.slane %v640, 4
  %v644 = vshrl.u32 %v524, 16
  %v646 = vrot.slane %v644, 5
  %v647 = vshll.u32 %v524, 16
  %v649 = vrot.slane %v647, 6
  %v650 = vor.u32 %v646, %v649
  %v651 = vsel %vm539, %v642, %v650
  %v653 = vshrl.u32 %v525, 16
  %v655 = vrot.slane %v653, 5
  %v656 = vshll.u32 %v525, 16
  %v658 = vrot.slane %v656, 6
  %v659 = vor.u32 %v655, %v658
  %v660 = vrot.slane %v659, 4
  %v662 = vshrl.u32 %v526, 16
  %v664 = vrot.slane %v662, 5
  %v665 = vshll.u32 %v526, 16
  %v667 = vrot.slane %v665, 6
  %v668 = vor.u32 %v664, %v667
  %v669 = vsel %vm539, %v660, %v668
  %v670 = vrot.slane %v668, 4
  %v672 = vshrl.u32 %v527, 16
  %v674 = vrot.slane %v672, 5
  %v675 = vshll.u32 %v527, 16
  %v677 = vrot.slane %v675, 6
  %v678 = vor.u32 %v674, %v677
  %v679 = vsel %vm539, %v670, %v678
  %v681 = vshrl.u32 %v528, 16
  %v683 = vrot.slane %v681, 5
  %v684 = vshll.u32 %v528, 16
  %v686 = vrot.slane %v684, 6
  %v687 = vor.u32 %v683, %v686
  %v688 = vrot.slane %v687, 4
  %v690 = vshrl.u32 %v529, 16
  %v692 = vrot.slane %v690, 5
  %v693 = vshll.u32 %v529, 16
  %v695 = vrot.slane %v693, 6
  %v696 = vor.u32 %v692, %v695
  %v697 = vsel %vm539, %v688, %v696
  %v698 = vrot.slane %v696, 4
  %v700 = vshrl.u32 %v530, 16
  %v702 = vrot.slane %v700, 5
  %v703 = vshll.u32 %v530, 16
  %v705 = vrot.slane %v703, 6
  %v706 = vor.u32 %v702, %v705
  %v707 = vsel %vm539, %v698, %v706
  %v709 = vshrl.u32 %v531, 16
  %v711 = vrot.slane %v709, 5
  %v712 = vshll.u32 %v531, 16
  %v714 = vrot.slane %v712, 6
  %v715 = vor.u32 %v711, %v714
  %v716 = vrot.slane %v715, 4
  %v718 = vshrl.u32 %v532, 16
  %v720 = vrot.slane %v718, 5
  %v721 = vshll.u32 %v532, 16
  %v723 = vrot.slane %v721, 6
  %v724 = vor.u32 %v720, %v723
  %v725 = vsel %vm539, %v716, %v724
  %v726 = vrot.slane %v724, 4
  %v728 = vshrl.u32 %v533, 16
  %v730 = vrot.slane %v728, 5
  %v731 = vshll.u32 %v533, 16
  %v733 = vrot.slane %v731, 6
  %v734 = vor.u32 %v730, %v733
  %v735 = vsel %vm539, %v726, %v734
  %v737 = vshrl.u32 %v534, 16
  %v739 = vrot.slane %v737, 5
  %v740 = vshll.u32 %v534, 16
  %v742 = vrot.slane %v740, 6
  %v743 = vor.u32 %v739, %v742
  %v744 = vrot.slane %v743, 4
  %v746 = vshrl.u32 %v535, 16
  %v748 = vrot.slane %v746, 5
  %v749 = vshll.u32 %v535, 16
  %v751 = vrot.slane %v749, 6
  %v752 = vor.u32 %v748, %v751
  %v753 = vsel %vm539, %v744, %v752
  %v754 = vrot.slane %v752, 4
  %v756 = vshrl.u32 %v536, 16
  %v758 = vrot.slane %v756, 5
  %v759 = vshll.u32 %v536, 16
  %v761 = vrot.slane %v759, 6
  %v762 = vor.u32 %v758, %v761
  %v763 = vsel %vm539, %v754, %v762
  %764 = vrot.lane.b32.xlu0 %v557, 96
  %v765 = vpop.permute.xlu0 %764
  %766 = vrot.lane.b32.xlu0 %v567, 96
  %v767 = vpop.permute.xlu0 %766
  %768 = vrot.lane.b32.xlu0 %v585, 96
  %v769 = vpop.permute.xlu0 %768
  %770 = vrot.lane.b32.xlu0 %v595, 96
  %v771 = vpop.permute.xlu0 %770
  %772 = vrot.lane.b32.xlu0 %v613, 96
  %v773 = vpop.permute.xlu0 %772
  %774 = vrot.lane.b32.xlu0 %v623, 96
  %v775 = vpop.permute.xlu0 %774
  %776 = vrot.lane.b32.xlu0 %v641, 96
  %v777 = vpop.permute.xlu0 %776
  %778 = vrot.lane.b32.xlu0 %v651, 96
  %v779 = vpop.permute.xlu0 %778
  %780 = vrot.lane.b32.xlu0 %v669, 96
  %v781 = vpop.permute.xlu0 %780
  %782 = vrot.lane.b32.xlu0 %v679, 96
  %v783 = vpop.permute.xlu0 %782
  %784 = vrot.lane.b32.xlu0 %v697, 96
  %v785 = vpop.permute.xlu0 %784
  %786 = vrot.lane.b32.xlu0 %v707, 96
  %v787 = vpop.permute.xlu0 %786
  %788 = vrot.lane.b32.xlu0 %v725, 96
  %v789 = vpop.permute.xlu0 %788
  %790 = vrot.lane.b32.xlu0 %v735, 96
  %v791 = vpop.permute.xlu0 %790
  %792 = vrot.lane.b32.xlu0 %v753, 96
  %v793 = vpop.permute.xlu0 %792
  %794 = vrot.lane.b32.xlu0 %v763, 96
  %v795 = vpop.permute.xlu0 %794
  %vm812 = vcmask 1044224
  %813 = vst.msk [vmem:[#allocation2] sm:$0xf] %vm812, %v765
  %814 = vst.msk [vmem:[#allocation2 + $0x8] sm:$0xf] %vm812, %v767
  %815 = vst.msk [vmem:[#allocation2 + $0x10] sm:$0xf] %vm812, %v769
  %816 = vst.msk [vmem:[#allocation2 + $0x18] sm:$0xf] %vm812, %v771
  %817 = vst.msk [vmem:[#allocation2 + $0x20] sm:$0xf] %vm812, %v773
  %818 = vst.msk [vmem:[#allocation2 + $0x28] sm:$0xf] %vm812, %v775
  %819 = vst.msk [vmem:[#allocation2 + $0x30] sm:$0xf] %vm812, %v777
  %820 = vst.msk [vmem:[#allocation2 + $0x38] sm:$0xf] %vm812, %v779
  %821 = vst.msk [vmem:[#allocation2 + $0x40] sm:$0xf] %vm812, %v781
  %822 = vst.msk [vmem:[#allocation2 + $0x48] sm:$0xf] %vm812, %v783
  %823 = vst.msk [vmem:[#allocation2 + $0x50] sm:$0xf] %vm812, %v785
  %824 = vst.msk [vmem:[#allocation2 + $0x58] sm:$0xf] %vm812, %v787
  %825 = vst.msk [vmem:[#allocation2 + $0x60] sm:$0xf] %vm812, %v789
  %826 = vst.msk [vmem:[#allocation2 + $0x68] sm:$0xf] %vm812, %v791
  %827 = vst.msk [vmem:[#allocation2 + $0x70] sm:$0xf] %vm812, %v793
  %828 = vst.msk [vmem:[#allocation2 + $0x78] sm:$0xf] %vm812, %v795
  %v829 = vld [vmem:[%s0] sm:$0xc]
  %v830 = vld [vmem:[%s0 + $0x4] sm:$0xf]
  %v831 = vld [vmem:[%s0 + $0x8] sm:$0x3]
  %v832 = vld [vmem:[%s0 + $0xc] sm:$0xc]
  %v833 = vld [vmem:[%s0 + $0x10] sm:$0xf]
  %v834 = vld [vmem:[%s0 + $0x14] sm:$0x3]
  %v835 = vld [vmem:[%s0 + $0x18] sm:$0xc]
  %v836 = vld [vmem:[%s0 + $0x1c] sm:$0xf]
  %v837 = vld [vmem:[%s0 + $0x20] sm:$0x3]
  %v838 = vld [vmem:[%s0 + $0x24] sm:$0xc]
  %v839 = vld [vmem:[%s0 + $0x28] sm:$0xf]
  %v840 = vld [vmem:[%s0 + $0x2c] sm:$0x3]
  %v841 = vld [vmem:[%s0 + $0x30] sm:$0xc]
  %v842 = vld [vmem:[%s0 + $0x34] sm:$0xf]
  %v843 = vld [vmem:[%s0 + $0x38] sm:$0x3]
  %v844 = vld [vmem:[%s0 + $0x3c] sm:$0xc]
  %v845 = vld [vmem:[%s0 + $0x40] sm:$0xf]
  %v846 = vld [vmem:[%s0 + $0x44] sm:$0x3]
  %v847 = vld [vmem:[%s0 + $0x48] sm:$0xc]
  %v848 = vld [vmem:[%s0 + $0x4c] sm:$0xf]
  %v849 = vld [vmem:[%s0 + $0x50] sm:$0x3]
  %v850 = vld [vmem:[%s0 + $0x54] sm:$0xc]
  %v851 = vld [vmem:[%s0 + $0x58] sm:$0xf]
  %v852 = vld [vmem:[%s0 + $0x5c] sm:$0x3]
  %vm877 = vcmask 1041408
  %vm878 = vcmask 1045508
  %vm879 = vmor %vm877, %vm878
  %v880 = vrot.slane %v829, 6
  %v881 = vrot.slane %v880, 4
  %v882 = vrot.slane %v830, 6
  %v883 = vsel %vm879, %v881, %v882
  %v884 = vrot.slane %v882, 4
  %v885 = vrot.slane %v831, 6
  %v886 = vsel %vm879, %v884, %v885
  %v887 = vrot.slane %v832, 6
  %v888 = vrot.slane %v887, 4
  %v889 = vrot.slane %v833, 6
  %v890 = vsel %vm879, %v888, %v889
  %v891 = vrot.slane %v889, 4
  %v892 = vrot.slane %v834, 6
  %v893 = vsel %vm879, %v891, %v892
  %v894 = vrot.slane %v835, 6
  %v895 = vrot.slane %v894, 4
  %v896 = vrot.slane %v836, 6
  %v897 = vsel %vm879, %v895, %v896
  %v898 = vrot.slane %v896, 4
  %v899 = vrot.slane %v837, 6
  %v900 = vsel %vm879, %v898, %v899
  %v901 = vrot.slane %v838, 6
  %v902 = vrot.slane %v901, 4
  %v903 = vrot.slane %v839, 6
  %v904 = vsel %vm879, %v902, %v903
  %v905 = vrot.slane %v903, 4
  %v906 = vrot.slane %v840, 6
  %v907 = vsel %vm879, %v905, %v906
  %v908 = vrot.slane %v841, 6
  %v909 = vrot.slane %v908, 4
  %v910 = vrot.slane %v842, 6
  %v911 = vsel %vm879, %v909, %v910
  %v912 = vrot.slane %v910, 4
  %v913 = vrot.slane %v843, 6
  %v914 = vsel %vm879, %v912, %v913
  %v915 = vrot.slane %v844, 6
  %v916 = vrot.slane %v915, 4
  %v917 = vrot.slane %v845, 6
  %v918 = vsel %vm879, %v916, %v917
  %v919 = vrot.slane %v917, 4
  %v920 = vrot.slane %v846, 6
  %v921 = vsel %vm879, %v919, %v920
  %v922 = vrot.slane %v847, 6
  %v923 = vrot.slane %v922, 4
  %v924 = vrot.slane %v848, 6
  %v925 = vsel %vm879, %v923, %v924
  %v926 = vrot.slane %v924, 4
  %v927 = vrot.slane %v849, 6
  %v928 = vsel %vm879, %v926, %v927
  %v929 = vrot.slane %v850, 6
  %v930 = vrot.slane %v929, 4
  %v931 = vrot.slane %v851, 6
  %v932 = vsel %vm879, %v930, %v931
  %v933 = vrot.slane %v931, 4
  %v934 = vrot.slane %v852, 6
  %v935 = vsel %vm879, %v933, %v934
  %952 = vst.msk [vmem:[#allocation2 + $0x4] sm:$0xf] %vm40, %v883
  %953 = vst.msk [vmem:[#allocation2 + $0xc] sm:$0xf] %vm40, %v886
  %954 = vst.msk [vmem:[#allocation2 + $0x14] sm:$0xf] %vm40, %v890
  %955 = vst.msk [vmem:[#allocation2 + $0x1c] sm:$0xf] %vm40, %v893
  %956 = vst.msk [vmem:[#allocation2 + $0x24] sm:$0xf] %vm40, %v897
  %957 = vst.msk [vmem:[#allocation2 + $0x2c] sm:$0xf] %vm40, %v900
  %958 = vst.msk [vmem:[#allocation2 + $0x34] sm:$0xf] %vm40, %v904
  %959 = vst.msk [vmem:[#allocation2 + $0x3c] sm:$0xf] %vm40, %v907
  %960 = vst.msk [vmem:[#allocation2 + $0x44] sm:$0xf] %vm40, %v911
  %961 = vst.msk [vmem:[#allocation2 + $0x4c] sm:$0xf] %vm40, %v914
  %962 = vst.msk [vmem:[#allocation2 + $0x54] sm:$0xf] %vm40, %v918
  %963 = vst.msk [vmem:[#allocation2 + $0x5c] sm:$0xf] %vm40, %v921
  %964 = vst.msk [vmem:[#allocation2 + $0x64] sm:$0xf] %vm40, %v925
  %965 = vst.msk [vmem:[#allocation2 + $0x6c] sm:$0xf] %vm40, %v928
  %966 = vst.msk [vmem:[#allocation2 + $0x74] sm:$0xf] %vm40, %v932
  %967 = vst.msk [vmem:[#allocation2 + $0x7c] sm:$0xf] %vm40, %v935
  %v968 = vld [vmem:[#allocation2] sm:$0xff]
  %v969 = vld [vmem:[#allocation2 + $0x8] sm:$0xff]
  %v970 = vld [vmem:[#allocation2 + $0x10] sm:$0xff]
  %v971 = vld [vmem:[#allocation2 + $0x18] sm:$0xff]
  %v972 = vld [vmem:[#allocation2 + $0x20] sm:$0xff]
  %v973 = vld [vmem:[#allocation2 + $0x28] sm:$0xff]
  %v974 = vld [vmem:[#allocation2 + $0x30] sm:$0xff]
  %v975 = vld [vmem:[#allocation2 + $0x38] sm:$0xff]
  %v976 = vld [vmem:[#allocation2 + $0x40] sm:$0xff]
  %v977 = vld [vmem:[#allocation2 + $0x48] sm:$0xff]
  %v978 = vld [vmem:[#allocation2 + $0x50] sm:$0xff]
  %v979 = vld [vmem:[#allocation2 + $0x58] sm:$0xff]
  %v980 = vld [vmem:[#allocation2 + $0x60] sm:$0xff]
  %v981 = vld [vmem:[#allocation2 + $0x68] sm:$0xff]
  %v982 = vld [vmem:[#allocation2 + $0x70] sm:$0xff]
  %v983 = vld [vmem:[#allocation2 + $0x78] sm:$0xff]
  %v984 = vld [vmem:[%s1] sm:$0xf]
  %v985 = vld [vmem:[%s1 + $0x4] sm:$0xf]
  %v986 = vld [vmem:[%s1 + $0x8] sm:$0xf]
  %v987 = vld [vmem:[%s1 + $0xc] sm:$0xf]
  %v988 = vld [vmem:[%s1 + $0x10] sm:$0xf]
  %v989 = vld [vmem:[%s1 + $0x14] sm:$0xf]
  %v990 = vld [vmem:[%s1 + $0x18] sm:$0xf]
  %v991 = vld [vmem:[%s1 + $0x1c] sm:$0xf]
  %v992 = vld [vmem:[%s1 + $0x20] sm:$0xf]
  %v993 = vld [vmem:[%s1 + $0x24] sm:$0xf]
  %v994 = vld [vmem:[%s1 + $0x28] sm:$0xf]
  %v995 = vld [vmem:[%s1 + $0x2c] sm:$0xf]
  %v996 = vld [vmem:[%s1 + $0x30] sm:$0xf]
  %v997 = vld [vmem:[%s1 + $0x34] sm:$0xf]
  %v998 = vld [vmem:[%s1 + $0x38] sm:$0xf]
  %v999 = vld [vmem:[%s1 + $0x3c] sm:$0xf]
  %v1000 = vld [vmem:[%s1 + $0x40] sm:$0xf]
  %v1001 = vld [vmem:[%s1 + $0x44] sm:$0xf]
  %v1002 = vld [vmem:[%s1 + $0x48] sm:$0xf]
  %v1003 = vld [vmem:[%s1 + $0x4c] sm:$0xf]
  %v1020 = vunpack.c.l.b16 %v968
  %v1021 = vunpack.c.h.b16 %v968
  %v1022 = vunpack.c.l.b16 %v969
  %v1023 = vunpack.c.h.b16 %v969
  %v1024 = vunpack.c.l.b16 %v970
  %v1025 = vunpack.c.h.b16 %v970
  %v1026 = vunpack.c.l.b16 %v971
  %v1027 = vunpack.c.h.b16 %v971
  %v1028 = vunpack.c.l.b16 %v972
  %v1029 = vunpack.c.h.b16 %v972
  %v1030 = vunpack.c.l.b16 %v973
  %v1031 = vunpack.c.h.b16 %v973
  %v1032 = vunpack.c.l.b16 %v974
  %v1033 = vunpack.c.h.b16 %v974
  %v1034 = vunpack.c.l.b16 %v975
  %v1035 = vunpack.c.h.b16 %v975
  %v1036 = vunpack.c.l.b16 %v976
  %v1037 = vunpack.c.h.b16 %v976
  %v1038 = vunpack.c.l.b16 %v977
  %v1039 = vunpack.c.h.b16 %v977
  %v1040 = vunpack.c.l.b16 %v978
  %v1041 = vunpack.c.h.b16 %v978
  %v1042 = vunpack.c.l.b16 %v979
  %v1043 = vunpack.c.h.b16 %v979
  %v1044 = vunpack.c.l.b16 %v980
  %v1045 = vunpack.c.h.b16 %v980
  %v1046 = vunpack.c.l.b16 %v981
  %v1047 = vunpack.c.h.b16 %v981
  %v1048 = vunpack.c.l.b16 %v982
  %v1049 = vunpack.c.h.b16 %v982
  %v1050 = vunpack.c.l.b16 %v983
  %v1051 = vunpack.c.h.b16 %v983
  %v1052 = vpack.c.b16 %v1022, %v1020
  %v1053 = vpack.c.b16 %v1023, %v1021
  %v1054 = vpack.c.b16 %v1026, %v1024
  %v1055 = vpack.c.b16 %v1027, %v1025
  %v1056 = vpack.c.b16 %v1030, %v1028
  %v1057 = vpack.c.b16 %v1031, %v1029
  %v1058 = vpack.c.b16 %v1034, %v1032
  %v1059 = vpack.c.b16 %v1035, %v1033
  %v1060 = vpack.c.b16 %v1038, %v1036
  %v1061 = vpack.c.b16 %v1039, %v1037
  %v1062 = vpack.c.b16 %v1042, %v1040
  %v1063 = vpack.c.b16 %v1043, %v1041
  %v1064 = vpack.c.b16 %v1046, %v1044
  %v1065 = vpack.c.b16 %v1047, %v1045
  %v1066 = vpack.c.b16 %v1050, %v1048
  %v1067 = vpack.c.b16 %v1051, %v1049
  %v1096 = vunpack.c.l.b16 %v984
  %v1097 = vunpack.c.l.b16 %v985
  %v1098 = vunpack.c.l.b16 %v986
  %v1099 = vunpack.c.l.b16 %v987
  %v1100 = vunpack.c.l.b16 %v988
  %v1101 = vunpack.c.l.b16 %v989
  %v1102 = vunpack.c.l.b16 %v990
  %v1103 = vunpack.c.l.b16 %v991
  %v1104 = vunpack.c.l.b16 %v992
  %v1105 = vunpack.c.l.b16 %v993
  %v1106 = vunpack.c.l.b16 %v994
  %v1107 = vunpack.c.l.b16 %v995
  %v1108 = vunpack.c.l.b16 %v996
  %v1109 = vunpack.c.l.b16 %v997
  %v1110 = vunpack.c.l.b16 %v998
  %v1111 = vunpack.c.l.b16 %v999
  %v1112 = vunpack.c.l.b16 %v1000
  %v1113 = vunpack.c.l.b16 %v1001
  %v1114 = vunpack.c.l.b16 %v1002
  %v1115 = vunpack.c.l.b16 %v1003
  %v1116 = vpack.c.b16 %v1097, %v1096
  %v1117 = vpack.c.b16 %v1099, %v1098
  %v1118 = vpack.c.b16 %v1101, %v1100
  %v1119 = vpack.c.b16 %v1103, %v1102
  %v1120 = vpack.c.b16 %v1105, %v1104
  %v1121 = vpack.c.b16 %v1107, %v1106
  %v1122 = vpack.c.b16 %v1109, %v1108
  %v1123 = vpack.c.b16 %v1111, %v1110
  %v1124 = vpack.c.b16 %v1113, %v1112
  %v1125 = vpack.c.b16 %v1115, %v1114
  %vm1136 = vcmask 261120
  %v1138 = vsel %vm1136, %v1053, 0
  %v1141 = vsel %vm1136, %v1055, 0
  %v1144 = vsel %vm1136, %v1057, 0
  %v1147 = vsel %vm1136, %v1059, 0
  %v1150 = vsel %vm1136, %v1061, 0
  %v1153 = vsel %vm1136, %v1063, 0
  %v1156 = vsel %vm1136, %v1065, 0
  %v1159 = vsel %vm1136, %v1067, 0
  %1161 = vmatprep.subr.bf16.mxu0 0
  %1162 = vmatpush1.bf16.msra.mxu0 %v1123
  %1163 = vmatprep.subr.bf16.mxu0 0
  %1164 = vmatpush1.bf16.msra.mxu0 %v1122
  %1165 = vmatprep.subr.bf16.mxu0 0
  %1166 = vmatpush1.bf16.msra.mxu0 %v1121
  %1167 = vmatprep.subr.bf16.mxu0 0
  %1168 = vmatpush1.bf16.msra.mxu0 %v1120
  %1169 = vmatprep.subr.bf16.mxu0 0
  %1170 = vmatpush1.bf16.msra.mxu0 %v1119
  %1171 = vmatprep.subr.bf16.mxu0 0
  %1172 = vmatpush1.bf16.msra.mxu0 %v1118
  %1173 = vmatprep.subr.bf16.mxu0 0
  %1174 = vmatpush1.bf16.msra.mxu0 %v1117
  %1175 = vmatprep.subr.bf16.mxu0 0
  %1176 = vmatpush1.bf16.msra.mxu0 %v1116
  %1177 = vmatprep.subr.bf16.mxu0 0
  %1178 = vmatpush2.bf16.msra.mxu0 0
  %1179 = vmatprep.subr.bf16.mxu0 0
  %1180 = vmatpush2.bf16.msra.mxu0 0
  %1181 = vmatprep.subr.bf16.mxu0 0
  %1182 = vmatpush2.bf16.msra.mxu0 0
  %1183 = vmatprep.subr.bf16.mxu0 0
  %1184 = vmatpush2.bf16.msra.mxu0 0
  %1185 = vmatprep.subr.bf16.mxu0 0
  %1186 = vmatpush2.bf16.msra.mxu0 0
  %1187 = vmatprep.subr.bf16.mxu0 0
  %1188 = vmatpush2.bf16.msra.mxu0 0
  %1189 = vmatprep.subr.bf16.mxu0 0
  %1190 = vmatpush2.bf16.msra.mxu0 %v1125
  %1191 = vmatprep.subr.bf16.mxu0 0
  %1192 = vmatpush2.bf16.msra.mxu0 %v1124
  %1193 = vmatprep.mubr.bf16.mxu0 %v1138
  %1194 = vmatmul.mubr.bf16.gmra.mxu0 %v1052
  %v1195 = vpop.f32.mrf.mxu0
  %v1196 = vadd.f32 0.0, %v1195
  %v1197 = vpop.f32.mrf.mxu0
  %v1198 = vpop.f32.mrf.mxu0
  %v1199 = vadd.f32 0.0, %v1198
  %v1200 = vpop.f32.mrf.mxu0
  %1201 = vmatprep.mubr.bf16.mxu0 %v1141
  %1202 = vmatmul.mubr.bf16.gmra.mxu0 %v1054
  %v1203 = vpop.f32.mrf.mxu0
  %v1204 = vadd.f32 0.0, %v1203
  %v1205 = vpop.f32.mrf.mxu0
  %v1206 = vpop.f32.mrf.mxu0
  %v1207 = vadd.f32 0.0, %v1206
  %v1208 = vpop.f32.mrf.mxu0
  %1209 = vmatprep.mubr.bf16.mxu0 %v1144
  %1210 = vmatmul.mubr.bf16.gmra.mxu0 %v1056
  %v1211 = vpop.f32.mrf.mxu0
  %v1212 = vadd.f32 0.0, %v1211
  %v1213 = vpop.f32.mrf.mxu0
  %v1214 = vpop.f32.mrf.mxu0
  %v1215 = vadd.f32 0.0, %v1214
  %v1216 = vpop.f32.mrf.mxu0
  %1217 = vmatprep.mubr.bf16.mxu0 %v1147
  %1218 = vmatmul.mubr.bf16.gmra.mxu0 %v1058
  %v1219 = vpop.f32.mrf.mxu0
  %v1220 = vadd.f32 0.0, %v1219
  %v1221 = vpop.f32.mrf.mxu0
  %v1222 = vpop.f32.mrf.mxu0
  %v1223 = vadd.f32 0.0, %v1222
  %v1224 = vpop.f32.mrf.mxu0
  %1225 = vmatprep.mubr.bf16.mxu0 %v1150
  %1226 = vmatmul.mubr.bf16.gmra.mxu0 %v1060
  %v1227 = vpop.f32.mrf.mxu0
  %v1228 = vadd.f32 0.0, %v1227
  %v1229 = vpop.f32.mrf.mxu0
  %v1230 = vpop.f32.mrf.mxu0
  %v1231 = vadd.f32 0.0, %v1230
  %v1232 = vpop.f32.mrf.mxu0
  %1233 = vmatprep.mubr.bf16.mxu0 %v1153
  %1234 = vmatmul.mubr.bf16.gmra.mxu0 %v1062
  %v1235 = vpop.f32.mrf.mxu0
  %v1236 = vadd.f32 0.0, %v1235
  %v1237 = vpop.f32.mrf.mxu0
  %v1238 = vpop.f32.mrf.mxu0
  %v1239 = vadd.f32 0.0, %v1238
  %v1240 = vpop.f32.mrf.mxu0
  %1241 = vmatprep.mubr.bf16.mxu0 %v1156
  %1242 = vmatmul.mubr.bf16.gmra.mxu0 %v1064
  %v1243 = vpop.f32.mrf.mxu0
  %v1244 = vadd.f32 0.0, %v1243
  %v1245 = vpop.f32.mrf.mxu0
  %v1246 = vpop.f32.mrf.mxu0
  %v1247 = vadd.f32 0.0, %v1246
  %v1248 = vpop.f32.mrf.mxu0
  %1249 = vmatprep.mubr.bf16.mxu0 %v1159
  %1250 = vmatmul.mubr.bf16.gmra.mxu0 %v1066
  %v1251 = vpop.f32.mrf.mxu0
  %v1252 = vadd.f32 0.0, %v1251
  %v1253 = vpop.f32.mrf.mxu0
  %v1254 = vpop.f32.mrf.mxu0
  %v1255 = vadd.f32 0.0, %v1254
  %v1256 = vpop.f32.mrf.mxu0
  %1257 = vdwg.mxu0
  %v1258 = vld [vmem:[%s3] sm:$0xff]
  %v1259 = vld [vmem:[%s3 + $0x8] sm:$0xff]
  %v1260 = vadd.f32 %v1196, %v1258
  %v1261 = vadd.f32 %v1199, %v1259
  %v1262 = vadd.f32 %v1204, %v1258
  %v1263 = vadd.f32 %v1207, %v1259
  %v1264 = vadd.f32 %v1212, %v1258
  %v1265 = vadd.f32 %v1215, %v1259
  %v1266 = vadd.f32 %v1220, %v1258
  %v1267 = vadd.f32 %v1223, %v1259
  %v1268 = vadd.f32 %v1228, %v1258
  %v1269 = vadd.f32 %v1231, %v1259
  %v1270 = vadd.f32 %v1236, %v1258
  %v1271 = vadd.f32 %v1239, %v1259
  %v1272 = vadd.f32 %v1244, %v1258
  %v1273 = vadd.f32 %v1247, %v1259
  %v1274 = vadd.f32 %v1252, %v1258
  %v1275 = vadd.f32 %v1255, %v1259
  %v1276 = vmax.f32 %v1260, %v1261
  %v1277 = vrot.slane %v1276, 4
  %v1278 = vmax.f32 %v1276, %v1277
  %v1279 = vrot.slane %v1278, 2
  %v1280 = vmax.f32 %v1278, %v1279
  %v1281 = vrot.slane %v1280, 1
  %v1282 = vmax.f32 %v1280, %v1281
  %v1283 = vmax.f32 %v1262, %v1263
  %v1284 = vrot.slane %v1283, 4
  %v1285 = vmax.f32 %v1283, %v1284
  %v1286 = vrot.slane %v1285, 2
  %v1287 = vmax.f32 %v1285, %v1286
  %v1288 = vrot.slane %v1287, 1
  %v1289 = vmax.f32 %v1287, %v1288
  %v1290 = vmax.f32 %v1264, %v1265
  %v1291 = vrot.slane %v1290, 4
  %v1292 = vmax.f32 %v1290, %v1291
  %v1293 = vrot.slane %v1292, 2
  %v1294 = vmax.f32 %v1292, %v1293
  %v1295 = vrot.slane %v1294, 1
  %v1296 = vmax.f32 %v1294, %v1295
  %v1297 = vmax.f32 %v1266, %v1267
  %v1298 = vrot.slane %v1297, 4
  %v1299 = vmax.f32 %v1297, %v1298
  %v1300 = vrot.slane %v1299, 2
  %v1301 = vmax.f32 %v1299, %v1300
  %v1302 = vrot.slane %v1301, 1
  %v1303 = vmax.f32 %v1301, %v1302
  %v1304 = vmax.f32 %v1268, %v1269
  %v1305 = vrot.slane %v1304, 4
  %v1306 = vmax.f32 %v1304, %v1305
  %v1307 = vrot.slane %v1306, 2
  %v1308 = vmax.f32 %v1306, %v1307
  %v1309 = vrot.slane %v1308, 1
  %v1310 = vmax.f32 %v1308, %v1309
  %v1311 = vmax.f32 %v1270, %v1271
  %v1312 = vrot.slane %v1311, 4
  %v1313 = vmax.f32 %v1311, %v1312
  %v1314 = vrot.slane %v1313, 2
  %v1315 = vmax.f32 %v1313, %v1314
  %v1316 = vrot.slane %v1315, 1
  %v1317 = vmax.f32 %v1315, %v1316
  %v1318 = vmax.f32 %v1272, %v1273
  %v1319 = vrot.slane %v1318, 4
  %v1320 = vmax.f32 %v1318, %v1319
  %v1321 = vrot.slane %v1320, 2
  %v1322 = vmax.f32 %v1320, %v1321
  %v1323 = vrot.slane %v1322, 1
  %v1324 = vmax.f32 %v1322, %v1323
  %v1325 = vmax.f32 %v1274, %v1275
  %v1326 = vrot.slane %v1325, 4
  %v1327 = vmax.f32 %v1325, %v1326
  %v1328 = vrot.slane %v1327, 2
  %v1329 = vmax.f32 %v1327, %v1328
  %v1330 = vrot.slane %v1329, 1
  %v1331 = vmax.f32 %v1329, %v1330
  %v1332 = vld [vmem:[%s2] sm:$0x1]
  %v1334 = vlaneseq
  %v1335 = vshrl.u32 %v1334, 7
  %v1336 = vsub.s32 0, %v1335
  %v1337 = vrot.slane %v1332, %v1336
  %v1339 = vadd.f32 %v1282, %v1337
  %v1340 = vadd.f32 %v1289, %v1337
  %v1341 = vadd.f32 %v1296, %v1337
  %v1342 = vadd.f32 %v1303, %v1337
  %v1343 = vadd.f32 %v1310, %v1337
  %v1344 = vadd.f32 %v1317, %v1337
  %v1345 = vadd.f32 %v1324, %v1337
  %v1346 = vadd.f32 %v1331, %v1337
  %v1347 = vmax.f32 %v1339, 0.0
  %v1348 = vmax.f32 %v1340, 0.0
  %v1349 = vmax.f32 %v1341, 0.0
  %v1350 = vmax.f32 %v1342, 0.0
  %v1351 = vmax.f32 %v1343, 0.0
  %v1352 = vmax.f32 %v1344, 0.0
  %v1353 = vmax.f32 %v1345, 0.0
  %v1354 = vmax.f32 %v1346, 0.0
  %v1355 = vpack.c.bf16 %v1347, %v1347
  %v1356 = vpack.c.bf16 %v1348, %v1348
  %v1357 = vpack.c.bf16 %v1349, %v1349
  %v1358 = vpack.c.bf16 %v1350, %v1350
  %v1359 = vpack.c.bf16 %v1351, %v1351
  %v1360 = vpack.c.bf16 %v1352, %v1352
  %v1361 = vpack.c.bf16 %v1353, %v1353
  %v1362 = vpack.c.bf16 %v1354, %v1354
  %v1363 = vld [vmem:[%s4] sm:$0xf]
  %v1364 = vld [vmem:[%s4 + $0x4] sm:$0xf]
  %v1365 = vld [vmem:[%s4 + $0x8] sm:$0xf]
  %v1366 = vld [vmem:[%s4 + $0xc] sm:$0xf]
  %v1367 = vld [vmem:[%s4 + $0x10] sm:$0xf]
  %v1368 = vld [vmem:[%s4 + $0x14] sm:$0xf]
  %v1369 = vld [vmem:[%s4 + $0x18] sm:$0xf]
  %v1370 = vld [vmem:[%s4 + $0x1c] sm:$0xf]
  %v1371 = vld [vmem:[%s4 + $0x20] sm:$0xf]
  %v1372 = vld [vmem:[%s4 + $0x24] sm:$0xf]
  %v1373 = vld [vmem:[%s4 + $0x28] sm:$0xf]
  %v1374 = vld [vmem:[%s4 + $0x2c] sm:$0xf]
  %v1375 = vld [vmem:[%s4 + $0x30] sm:$0xf]
  %v1376 = vld [vmem:[%s4 + $0x34] sm:$0xf]
  %v1377 = vld [vmem:[%s4 + $0x38] sm:$0xf]
  %v1378 = vld [vmem:[%s4 + $0x3c] sm:$0xf]
  %v1379 = vld [vmem:[%s5] sm:$0x1]
  %v1381 = vlaneseq
  %v1382 = vshrl.u32 %v1381, 7
  %v1383 = vsub.s32 0, %v1382
  %v1384 = vrot.slane %v1379, %v1383
  %v1394 = vunpack.c.l.b16 %v1355
  %v1395 = vunpack.c.l.b16 %v1356
  %v1396 = vunpack.c.l.b16 %v1357
  %v1397 = vunpack.c.l.b16 %v1358
  %v1398 = vunpack.c.l.b16 %v1359
  %v1399 = vunpack.c.l.b16 %v1360
  %v1400 = vunpack.c.l.b16 %v1361
  %v1401 = vunpack.c.l.b16 %v1362
  %v1402 = vrot.slane %v1395, 7
  %vm1403 = vcmask 1041409
  %v1404 = vsel %vm1403, %v1402, %v1394
  %v1405 = vrot.slane %v1396, 6
  %vm1406 = vcmask 1042434
  %v1407 = vsel %vm1406, %v1405, %v1404
  %v1408 = vrot.slane %v1397, 5
  %vm1409 = vcmask 1043459
  %v1410 = vsel %vm1409, %v1408, %v1407
  %v1411 = vrot.slane %v1398, 4
  %vm1412 = vcmask 1044484
  %v1413 = vsel %vm1412, %v1411, %v1410
  %v1414 = vrot.slane %v1399, 3
  %vm1415 = vcmask 1045509
  %v1416 = vsel %vm1415, %v1414, %v1413
  %v1417 = vrot.slane %v1400, 2
  %vm1418 = vcmask 1046534
  %v1419 = vsel %vm1418, %v1417, %v1416
  %v1420 = vrot.slane %v1401, 1
  %vm1421 = vcmask 1047559
  %v1422 = vsel %vm1421, %v1420, %v1419
  %v1423 = vpack.c.b16 %v1422, %v1422
  %v1441 = vunpack.c.l.b16 %v1363
  %v1442 = vunpack.c.l.b16 %v1364
  %v1443 = vunpack.c.l.b16 %v1365
  %v1444 = vunpack.c.l.b16 %v1366
  %v1445 = vunpack.c.l.b16 %v1367
  %v1446 = vunpack.c.l.b16 %v1368
  %v1447 = vunpack.c.l.b16 %v1369
  %v1448 = vunpack.c.l.b16 %v1370
  %v1449 = vunpack.c.l.b16 %v1371
  %v1450 = vunpack.c.l.b16 %v1372
  %v1451 = vunpack.c.l.b16 %v1373
  %v1452 = vunpack.c.l.b16 %v1374
  %v1453 = vunpack.c.l.b16 %v1375
  %v1454 = vunpack.c.l.b16 %v1376
  %v1455 = vunpack.c.l.b16 %v1377
  %v1456 = vunpack.c.l.b16 %v1378
  %v1457 = vpack.c.b16 %v1442, %v1441
  %v1458 = vpack.c.b16 %v1444, %v1443
  %v1459 = vpack.c.b16 %v1446, %v1445
  %v1460 = vpack.c.b16 %v1448, %v1447
  %v1461 = vpack.c.b16 %v1450, %v1449
  %v1462 = vpack.c.b16 %v1452, %v1451
  %v1463 = vpack.c.b16 %v1454, %v1453
  %v1464 = vpack.c.b16 %v1456, %v1455
  %1473 = vmatprep.subr.bf16.mxu0 0
  %1474 = vmatpush1.bf16.msra.mxu0 %v1464
  %1475 = vmatprep.subr.bf16.mxu0 0
  %1476 = vmatpush1.bf16.msra.mxu0 %v1463
  %1477 = vmatprep.subr.bf16.mxu0 0
  %1478 = vmatpush1.bf16.msra.mxu0 %v1462
  %1479 = vmatprep.subr.bf16.mxu0 0
  %1480 = vmatpush1.bf16.msra.mxu0 %v1461
  %1481 = vmatprep.subr.bf16.mxu0 0
  %1482 = vmatpush1.bf16.msra.mxu0 %v1460
  %1483 = vmatprep.subr.bf16.mxu0 0
  %1484 = vmatpush1.bf16.msra.mxu0 %v1459
  %1485 = vmatprep.subr.bf16.mxu0 0
  %1486 = vmatpush1.bf16.msra.mxu0 %v1458
  %1487 = vmatprep.subr.bf16.mxu0 0
  %1488 = vmatpush1.bf16.msra.mxu0 %v1457
  %1489 = vmatprep.subr.bf16.mxu0 0
  %1490 = vmatpush2.bf16.msra.mxu0 0
  %1491 = vmatprep.subr.bf16.mxu0 0
  %1492 = vmatpush2.bf16.msra.mxu0 0
  %1493 = vmatprep.subr.bf16.mxu0 0
  %1494 = vmatpush2.bf16.msra.mxu0 0
  %1495 = vmatprep.subr.bf16.mxu0 0
  %1496 = vmatpush2.bf16.msra.mxu0 0
  %1497 = vmatprep.subr.bf16.mxu0 0
  %1498 = vmatpush2.bf16.msra.mxu0 0
  %1499 = vmatprep.subr.bf16.mxu0 0
  %1500 = vmatpush2.bf16.msra.mxu0 0
  %1501 = vmatprep.subr.bf16.mxu0 0
  %1502 = vmatpush2.bf16.msra.mxu0 0
  %1503 = vmatprep.subr.bf16.mxu0 0
  %1504 = vmatpush2.bf16.msra.mxu0 0
  %1505 = vmatprep.mubr.bf16.mxu0 0
  %1506 = vmatmul.mubr.bf16.gmra.mxu0 %v1423
  %v1507 = vpop.f32.mrf.mxu0
  %v1508 = vadd.f32 %v1384, %v1507
  %v1509 = vpop.f32.mrf.mxu0
  %v1510 = vpop.f32.mrf.mxu0
  %v1511 = vpop.f32.mrf.mxu0
  %1512 = vdwg.mxu0
  %1513 = vst [vmem:[%s6] sm:$0xff] %v1508
  // Predicated region
  $region26: #{textcnn_forward.1} parent=0 // pred_check
    _
  $region27: #{textcnn_forward.1} parent=0 // pred_check_branch
    %1515 = sbr.rel (0) target = $region29
  $region28: #{textcnn_forward.1} parent=0 // pred_region
    _
  $region29: #{textcnn_forward.1} parent=0 // pred_fallthru
    _
  // Predicated region
  $region30: #{textcnn_forward.1} parent=0 // pred_check
    _
  $region31: #{textcnn_forward.1} parent=0 // pred_check_branch
    %1517 = sbr.rel (0) target = $region33
  $region32: #{textcnn_forward.1} parent=0 // pred_region
    _
  $region33: #{textcnn_forward.1} parent=0 // pred_fallthru
    _

</llo_original>
